<compile_context>
chip_gen: v7x
topology: tpu7x:2x2x1
jax: 0.10.0
libtpu: 0.0.40
codegen_flags: <defaults>
</compile_context>

<pallas_src>
import functools

import jax
import jax.numpy as jnp
from jax.experimental import pallas as pl
from jax.experimental.pallas import tpu as pltpu


def _round_up(n, m):
    return ((n + m - 1) // m) * m


def _cdiv(a, b):
    return -(-a // b)


def _prior_disc_kernel(x_ref, w0_ref, b0_ref, w1_ref, b1_ref, w2_ref, b2_ref, o_ref):
    """Whole MLP for one batch tile: (tb, Y) f32 -> (tb, 1) f32 probabilities."""
    # Layer 0 (MXU, bf16 operands, f32 accumulate): (tb, Y) @ (Y, 512).
    # x arrives as f32 straight from HBM; cast to bf16 here (VPU work hidden
    # under the MXU) instead of paying an extra HBM pass in the wrapper.
    x_b = x_ref[...].astype(jnp.bfloat16)
    h0 = jnp.dot(x_b, w0_ref[...], preferred_element_type=jnp.float32)
    h0 = jnp.maximum(h0 + b0_ref[...], 0.0)

    # Layer 1 (MXU): (tb, 512) @ (512, 128).
    h1 = jnp.dot(h0.astype(jnp.bfloat16), w1_ref[...],
                 preferred_element_type=jnp.float32)
    h1 = jnp.maximum(h1 + b1_ref[...], 0.0)

    # Layer 2 (MXU): (tb, 128) @ (128, 128) where only column 0 of w2_ref holds
    # the real weights.  Keeps the 128-wide reduce off the XLU (only 2 XLUs on
    # v6e/v7x); the MXU has plenty of slack here.
    h2 = jnp.dot(h1.astype(jnp.bfloat16), w2_ref[...],
                 preferred_element_type=jnp.float32)
    logits = h2[:, :1] + b2_ref[0]                      # (tb, 1), b2 from SMEM

    # Sigmoid via EUP exp + EUP approximate reciprocal (keeps VALU slot clear).
    probs = pl.reciprocal(1.0 + jnp.exp(-logits), approx=True)
    o_ref[...] = probs.astype(o_ref.dtype)


def _pick_batch_tile(B, block_b):
    """Batch tile: multiple of 16 (bf16 packing) or the full batch.

    * B >  block_b          -> tb = block_b (many pipelined steps).
    * 1024 <= B <= block_b  -> split into 2 tiles so the "parallel" axis can
                               use both TensorCores on v7x.
    * B < 1024              -> one full-batch tile (full-dim block is legal
                               regardless of divisibility); step overhead
                               dominates at this size anyway.
    All branches guarantee tb <= B, so blocks never exceed the array extent.
    """
    if B > block_b:
        return block_b
    if B >= 1024:
        return _round_up(_cdiv(B, 2), 16)
    return B


@functools.partial(jax.jit, static_argnames=("block_b",))
def prior_discriminator(x, w0, b0, w1, b1, w2, b2, *, block_b=2048):
    """x: (B, y_size) f32 -> (B, 1) f32 in (0, 1).

    Weights are stored transposed vs PyTorch: w0 (y_size,512), w1 (512,128),
    w2 (128,1); biases b0 (1,512), b1 (1,128), b2 (1,1).
    Matmul operands are bf16 (f32 accumulation) -- a real precision change vs
    the f32 PyTorch module; fine for a discriminator head.
    """
    assert block_b % 16 == 0, "block_b must be a multiple of 16 (bf16 packing)"
    B, y_size = x.shape
    h0_dim = w0.shape[1]   # 512
    h1_dim = w1.shape[1]   # 128

    tb = _pick_batch_tile(B, block_b)
    grid_b = _cdiv(B, tb)

    x_f = x.astype(jnp.float32)                      # no pad, no bf16 copy pass
    w0_b = w0.astype(jnp.bfloat16)
    w1_b = w1.astype(jnp.bfloat16)
    b0_f = b0.reshape(1, h0_dim).astype(jnp.float32)
    b1_f = b1.reshape(1, h1_dim).astype(jnp.float32)
    # Layer-2 weights as column 0 of a zero (128, 128) bf16 matrix (MXU reduce).
    w2_m = jnp.zeros((h1_dim, 128), jnp.bfloat16).at[:, 0].set(
        w2.reshape(h1_dim).astype(jnp.bfloat16))
    b2_s = b2.reshape(1).astype(jnp.float32)         # scalar bias -> SMEM

    flops = 2 * B * (y_size * h0_dim + h0_dim * h1_dim + h1_dim * 128)
    bytes_accessed = (B * y_size * 4                 # x (f32)
                      + y_size * h0_dim * 2 + h0_dim * h1_dim * 2
                      + h1_dim * 128 * 2             # weights (bf16)
                      + (h0_dim + h1_dim + 1) * 4    # biases
                      + B * 4)                       # output

    out = pl.pallas_call(
        _prior_disc_kernel,
        out_shape=jax.ShapeDtypeStruct((B, 1), jnp.float32),
        grid_spec=pltpu.PrefetchScalarGridSpec(
            num_scalar_prefetch=0,
            grid=(grid_b,),
            in_specs=[
                pl.BlockSpec((tb, y_size), lambda i: (i, 0)),       # x tile (f32)
                pl.BlockSpec((y_size, h0_dim), lambda i: (0, 0)),   # W0 (bf16, resident)
                pl.BlockSpec((1, h0_dim), lambda i: (0, 0)),        # b0 (f32)
                pl.BlockSpec((h0_dim, h1_dim), lambda i: (0, 0)),   # W1 (bf16, resident)
                pl.BlockSpec((1, h1_dim), lambda i: (0, 0)),        # b1 (f32)
                pl.BlockSpec((h1_dim, 128), lambda i: (0, 0)),      # W2 col-0 matrix
                pl.BlockSpec(memory_space=pltpu.MemorySpace.SMEM),  # b2 scalar
            ],
            out_specs=pl.BlockSpec((tb, 1), lambda i: (i, 0)),
        ),
        compiler_params=pltpu.CompilerParams(
            dimension_semantics=("parallel",),
            vmem_limit_bytes=32 * 1024 * 1024,   # tb=2048 fits on v5e's scoped VMEM too
        ),
        cost_estimate=pl.CostEstimate(
            flops=flops, transcendentals=B, bytes_accessed=bytes_accessed),
    )(x_f, w0_b, b0_f, w1_b, b1_f, w2_m, b2_s)

    return out


def _init_linear(key, fan_in, fan_out):
    """torch.nn.Linear-style U(-1/sqrt(fan_in), 1/sqrt(fan_in)) init.

    Returns W of shape (fan_in, fan_out) [transposed vs PyTorch] and b (1, fan_out).
    """
    kw, kb = jax.random.split(key)
    bound = 1.0 / jnp.sqrt(fan_in)
    w = jax.random.uniform(kw, (fan_in, fan_out), jnp.float32, -bound, bound)
    b = jax.random.uniform(kb, (1, fan_out), jnp.float32, -bound, bound)
    return w, b


def _reference(x, w0, b0, w1, b1, w2, b2):
    hp = jax.lax.Precision.HIGHEST
    h = jax.nn.relu(jnp.dot(x, w0, precision=hp) + b0)
    h = jax.nn.relu(jnp.dot(h, w1, precision=hp) + b1)
    return jax.nn.sigmoid(jnp.dot(h, w2, precision=hp) + b2)


if __name__ == "__main__":
    key = jax.random.PRNGKey(0)
    k_x, k_x2, k0, k1, k2 = jax.random.split(key, 5)

    Y_SIZE = 64  # encoder output size y_size
    w0, b0 = _init_linear(k0, Y_SIZE, 512)
    w1, b1 = _init_linear(k1, 512, 128)
    w2, b2 = _init_linear(k2, 128, 1)

    # Test 1: small batch -> single full-batch tile, single grid step.
    B = 8
    x = jax.random.normal(k_x, (B, Y_SIZE), jnp.float32)
    out = jax.block_until_ready(prior_discriminator(x, w0, b0, w1, b1, w2, b2))
    ref = _reference(x, w0, b0, w1, b1, w2, b2)
    assert out.shape == (B, 1), out.shape
    assert bool(jnp.all((out > 0.0) & (out < 1.0)))
    # bf16 matmul operands (f32 accumulation) + approx reciprocal -> relaxed tol.
    assert jnp.allclose(out, ref, atol=1e-2, rtol=1e-2)

    # Test 2: ragged batch with a small explicit tile -> multi-step grid with a
    # partial (masked) last block, no wrapper-side padding.
    B2 = 40
    x2 = jax.random.normal(k_x2, (B2, Y_SIZE), jnp.float32)
    out2 = jax.block_until_ready(
        prior_discriminator(x2, w0, b0, w1, b1, w2, b2, block_b=16))
    ref2 = _reference(x2, w0, b0, w1, b1, w2, b2)
    assert out2.shape == (B2, 1), out2.shape
    assert bool(jnp.all((out2 > 0.0) & (out2 < 1.0)))
    assert jnp.allclose(out2, ref2, atol=1e-2, rtol=1e-2)

    print("KERNEL_OK")
</pallas_src>

<mosaic_0001>
module attributes {stable_mosaic.version = 11 : i64} {
  func.func @_prior_disc_kernel(%arg0: i32, %arg1: memref<8x64xf32, #tpu.memory_space<vmem>>, %arg2: memref<64x512xbf16, #tpu.memory_space<vmem>>, %arg3: memref<1x512xf32, #tpu.memory_space<vmem>>, %arg4: memref<512x128xbf16, #tpu.memory_space<vmem>>, %arg5: memref<1x128xf32, #tpu.memory_space<vmem>>, %arg6: memref<128x128xbf16, #tpu.memory_space<vmem>>, %arg7: memref<1xf32, #tpu.memory_space<smem>>, %arg8: memref<8x1xf32, #tpu.memory_space<vmem>>) attributes {dimension_semantics = [#tpu.dimension_semantics<parallel>], iteration_bounds = array<i64: 1>, scalar_prefetch = 0 : i64, scratch_operands = 0 : i64, tpu.core_type = #tpu.core_type<tc>, window_params = [{transform_indices = @transform_0, window_bounds = array<i64: 8, 64>}, {pipeline_mode = #tpu.pipeline_mode<synchronous>, transform_indices = @transform_1, window_bounds = array<i64: 64, 512>}, {pipeline_mode = #tpu.pipeline_mode<synchronous>, transform_indices = @transform_2, window_bounds = array<i64: 1, 512>}, {pipeline_mode = #tpu.pipeline_mode<synchronous>, transform_indices = @transform_3, window_bounds = array<i64: 512, 128>}, {pipeline_mode = #tpu.pipeline_mode<synchronous>, transform_indices = @transform_4, window_bounds = array<i64: 1, 128>}, {pipeline_mode = #tpu.pipeline_mode<synchronous>, transform_indices = @transform_5, window_bounds = array<i64: 128, 128>}, {transform_indices = @transform_6, window_bounds = array<i64: 1>}, {transform_indices = @transform_7, window_bounds = array<i64: 8, 1>}]} {
    %c0 = arith.constant 0 : index
    %c0_0 = arith.constant 0 : index
    %0 = vector.load %arg1[%c0, %c0_0] : memref<8x64xf32, #tpu.memory_space<vmem>>, vector<8x64xf32>
    %1 = arith.truncf %0 : vector<8x64xf32> to vector<8x64xbf16>
    %c0_1 = arith.constant 0 : index
    %c0_2 = arith.constant 0 : index
    %2 = vector.load %arg2[%c0_1, %c0_2] : memref<64x512xbf16, #tpu.memory_space<vmem>>, vector<64x512xbf16>
    %cst = arith.constant dense<0.000000e+00> : vector<8x512xf32>
    %3 = tpu.matmul %1, %2, %cst {dimension_numbers = #tpu.dot_dimension_numbers<[1], [0], [0], [1], [0, 0, 1, 1], [], []>} : vector<8x64xbf16>, vector<64x512xbf16>, vector<8x512xf32> -> vector<8x512xf32>
    %c0_3 = arith.constant 0 : index
    %c0_4 = arith.constant 0 : index
    %4 = vector.load %arg3[%c0_3, %c0_4] : memref<1x512xf32, #tpu.memory_space<vmem>>, vector<1x512xf32>
    %5 = vector.broadcast %4 : vector<1x512xf32> to vector<8x512xf32>
    %6 = arith.addf %3, %5 : vector<8x512xf32>
    %cst_5 = arith.constant 0.000000e+00 : f32
    %7 = vector.broadcast %cst_5 : f32 to vector<8x512xf32>
    %8 = arith.maximumf %6, %7 : vector<8x512xf32>
    %9 = arith.truncf %8 : vector<8x512xf32> to vector<8x512xbf16>
    %c0_6 = arith.constant 0 : index
    %c0_7 = arith.constant 0 : index
    %10 = vector.load %arg4[%c0_6, %c0_7] : memref<512x128xbf16, #tpu.memory_space<vmem>>, vector<512x128xbf16>
    %cst_8 = arith.constant dense<0.000000e+00> : vector<8x128xf32>
    %11 = tpu.matmul %9, %10, %cst_8 {dimension_numbers = #tpu.dot_dimension_numbers<[1], [0], [0], [1], [0, 0, 1, 1], [], []>} : vector<8x512xbf16>, vector<512x128xbf16>, vector<8x128xf32> -> vector<8x128xf32>
    %c0_9 = arith.constant 0 : index
    %c0_10 = arith.constant 0 : index
    %12 = vector.load %arg5[%c0_9, %c0_10] : memref<1x128xf32, #tpu.memory_space<vmem>>, vector<1x128xf32>
    %13 = vector.broadcast %12 : vector<1x128xf32> to vector<8x128xf32>
    %14 = arith.addf %11, %13 : vector<8x128xf32>
    %cst_11 = arith.constant 0.000000e+00 : f32
    %15 = vector.broadcast %cst_11 : f32 to vector<8x128xf32>
    %16 = arith.maximumf %14, %15 : vector<8x128xf32>
    %17 = arith.truncf %16 : vector<8x128xf32> to vector<8x128xbf16>
    %c0_12 = arith.constant 0 : index
    %c0_13 = arith.constant 0 : index
    %18 = vector.load %arg6[%c0_12, %c0_13] : memref<128x128xbf16, #tpu.memory_space<vmem>>, vector<128x128xbf16>
    %cst_14 = arith.constant dense<0.000000e+00> : vector<8x128xf32>
    %19 = tpu.matmul %17, %18, %cst_14 {dimension_numbers = #tpu.dot_dimension_numbers<[1], [0], [0], [1], [0, 0, 1, 1], [], []>} : vector<8x128xbf16>, vector<128x128xbf16>, vector<8x128xf32> -> vector<8x128xf32>
    %20 = vector.extract_strided_slice %19 {offsets = [0, 0], sizes = [8, 1], strides = [1, 1]} : vector<8x128xf32> to vector<8x1xf32>
    %c0_15 = arith.constant 0 : index
    %21 = memref.load %arg7[%c0_15] : memref<1xf32, #tpu.memory_space<smem>>
    %22 = vector.broadcast %21 : f32 to vector<8x1xf32>
    %23 = arith.addf %20, %22 : vector<8x1xf32>
    %cst_16 = arith.constant 0.000000e+00 : f32
    %24 = vector.broadcast %cst_16 : f32 to vector<8x1xf32>
    %25 = arith.subf %24, %23 : vector<8x1xf32>
    %26 = math.exp %25 : vector<8x1xf32>
    %cst_17 = arith.constant 1.000000e+00 : f32
    %27 = vector.broadcast %cst_17 : f32 to vector<8x1xf32>
    %28 = arith.addf %27, %26 : vector<8x1xf32>
    %29 = tpu.reciprocal %28 {approx = true} : vector<8x1xf32> -> vector<8x1xf32>
    %c0_18 = arith.constant 0 : index
    %c0_19 = arith.constant 0 : index
    %30 = vector.load %arg8[%c0_18, %c0_19] : memref<8x1xf32, #tpu.memory_space<vmem>>, vector<8x1xf32>
    tpu.vector_store %arg8[%c0_18, %c0_19], %29 {strides = array<i32>} : memref<8x1xf32, #tpu.memory_space<vmem>>, vector<8x1xf32>,
    return
  }
  func.func @transform_0(%arg0: i32) -> (i32, i32) {
    %c0_i32 = arith.constant 0 : i32
    %c0_i32_0 = arith.constant 0 : i32
    return %arg0, %c0_i32 : i32, i32
  }
  func.func @transform_1(%arg0: i32) -> (i32, i32) {
    %c0_i32 = arith.constant 0 : i32
    %c0_i32_0 = arith.constant 0 : i32
    %c0_i32_1 = arith.constant 0 : i32
    return %c0_i32, %c0_i32_0 : i32, i32
  }
  func.func @transform_2(%arg0: i32) -> (i32, i32) {
    %c0_i32 = arith.constant 0 : i32
    %c0_i32_0 = arith.constant 0 : i32
    %c0_i32_1 = arith.constant 0 : i32
    return %c0_i32, %c0_i32_0 : i32, i32
  }
  func.func @transform_3(%arg0: i32) -> (i32, i32) {
    %c0_i32 = arith.constant 0 : i32
    %c0_i32_0 = arith.constant 0 : i32
    %c0_i32_1 = arith.constant 0 : i32
    return %c0_i32, %c0_i32_0 : i32, i32
  }
  func.func @transform_4(%arg0: i32) -> (i32, i32) {
    %c0_i32 = arith.constant 0 : i32
    %c0_i32_0 = arith.constant 0 : i32
    %c0_i32_1 = arith.constant 0 : i32
    return %c0_i32, %c0_i32_0 : i32, i32
  }
  func.func @transform_5(%arg0: i32) -> (i32, i32) {
    %c0_i32 = arith.constant 0 : i32
    %c0_i32_0 = arith.constant 0 : i32
    %c0_i32_1 = arith.constant 0 : i32
    return %c0_i32, %c0_i32_0 : i32, i32
  }
  func.func @transform_6(%arg0: i32) -> i32 {
    %c0_i32 = arith.constant 0 : i32
    %c0_i32_0 = arith.constant 0 : i32
    return %c0_i32 : i32
  }
  func.func @transform_7(%arg0: i32) -> (i32, i32) {
    %c0_i32 = arith.constant 0 : i32
    %c0_i32_0 = arith.constant 0 : i32
    return %arg0, %c0_i32 : i32, i32
  }
}

</mosaic_0001>

<llo_original>
// kernel: prior_discriminator.1
$region0: #{prior_discriminator.1}
  #allocation0 [shape = 'u32[]', space=smem, size = 0x4, offset = 0x4, fixed_abs, tag = 'smem constant byte address 0x4 - core index']
  #allocation1 [shape = 'u32[144,128]{1,0:T(1,128)}', space=vmem, size = 0x12000, scoped, tag = 'internal scratch']
  #allocation2 [shape = 'f32[1]{0:T(128)S(6)}', space=smem, size = 0x200, scoped, tag = 'scoped memory for prior_discriminator.1']
  %s0 = inlined_call_operand.vmem [shape: f32[8,64], index: 0, kind: input, shape index: {}]
  %s1 = inlined_call_operand.vmem [shape: bf16[64,512], index: 1, kind: input, shape index: {}]
  %s2 = inlined_call_operand.vmem [shape: f32[1,512], index: 2, kind: input, shape index: {}]
  %s3 = inlined_call_operand.vmem [shape: bf16[512,128], index: 3, kind: input, shape index: {}]
  %s4 = inlined_call_operand.vmem [shape: f32[1,128], index: 4, kind: input, shape index: {}]
  %s5 = inlined_call_operand.vmem [shape: bf16[128,128], index: 5, kind: input, shape index: {}]
  %s6 = inlined_call_operand.<no memory space> [shape: f32[1], index: 6, kind: input, shape index: {}]
  %s7 = inlined_call_operand.vmem [shape: f32[8,1], index: 7, kind: output, shape index: {}]
  %s8 = sld [smem:[#allocation0]]
  $region38: #{prior_discriminator.1} parent=0
    _
  %s10 = ssub.s32 1, %s8
  %s11 = scalar_select 0, %s10, %s8
  %12 = sst [smem:[#allocation2]] %s6
  // Predicated region
  $region2: #{prior_discriminator.1} parent=0 // pred_check
    _
  $region3: #{prior_discriminator.1} parent=0 // pred_check_branch
    %14 = sbr.rel (0) target = $region5
  $region4: #{prior_discriminator.1} parent=0 // pred_region
    _
  $region5: #{prior_discriminator.1} parent=0 // pred_fallthru
    _
  // Predicated region
  $region6: #{prior_discriminator.1} parent=0 // pred_check
    _
  $region7: #{prior_discriminator.1} parent=0 // pred_check_branch
    %16 = sbr.rel (0) target = $region9
  $region8: #{prior_discriminator.1} parent=0 // pred_region
    _
  $region9: #{prior_discriminator.1} parent=0 // pred_fallthru
    _
  // Predicated region
  $region10: #{prior_discriminator.1} parent=0 // pred_check
    _
  $region11: #{prior_discriminator.1} parent=0 // pred_check_branch
    %18 = sbr.rel (0) target = $region13
  $region12: #{prior_discriminator.1} parent=0 // pred_region
    _
  $region13: #{prior_discriminator.1} parent=0 // pred_fallthru
    _
  // Predicated region
  $region14: #{prior_discriminator.1} parent=0 // pred_check
    _
  $region15: #{prior_discriminator.1} parent=0 // pred_check_branch
    %20 = sbr.rel (0) target = $region17
  $region16: #{prior_discriminator.1} parent=0 // pred_region
    _
  $region17: #{prior_discriminator.1} parent=0 // pred_fallthru
    _
  // Predicated region
  $region18: #{prior_discriminator.1} parent=0 // pred_check
    _
  $region19: #{prior_discriminator.1} parent=0 // pred_check_branch
    %22 = sbr.rel (0) target = $region21
  $region20: #{prior_discriminator.1} parent=0 // pred_region
    _
  $region21: #{prior_discriminator.1} parent=0 // pred_fallthru
    _
  // Predicated region
  $region22: #{prior_discriminator.1} parent=0 // pred_check
    _
  $region23: #{prior_discriminator.1} parent=0 // pred_check_branch
    %24 = sbr.rel (0) target = $region25
  $region24: #{prior_discriminator.1} parent=0 // pred_region
    _
  $region25: #{prior_discriminator.1} parent=0 // pred_fallthru
    _
  // Predicated region
  $region26: #{prior_discriminator.1} parent=0 // pred_check
    _
  $region27: #{prior_discriminator.1} parent=0 // pred_check_branch
    %26 = sbr.rel (0) target = $region29
  $region28: #{prior_discriminator.1} parent=0 // pred_region
    _
  $region29: #{prior_discriminator.1} parent=0 // pred_fallthru
    _
  %v28 = vld [vmem:[%s0] sm:$0xff]
  %v29 = vpack.c.bf16 %v28, %v28
  %v30 = vld [vmem:[%s1] sm:$0xff]
  %v31 = vld [vmem:[%s1 + $0x8] sm:$0xff]
  %v32 = vld [vmem:[%s1 + $0x10] sm:$0xff]
  %v33 = vld [vmem:[%s1 + $0x18] sm:$0xff]
  %v34 = vld [vmem:[%s1 + $0x20] sm:$0xff]
  %v35 = vld [vmem:[%s1 + $0x28] sm:$0xff]
  %v36 = vld [vmem:[%s1 + $0x30] sm:$0xff]
  %v37 = vld [vmem:[%s1 + $0x38] sm:$0xff]
  %v38 = vld [vmem:[%s1 + $0x40] sm:$0xff]
  %v39 = vld [vmem:[%s1 + $0x48] sm:$0xff]
  %v40 = vld [vmem:[%s1 + $0x50] sm:$0xff]
  %v41 = vld [vmem:[%s1 + $0x58] sm:$0xff]
  %v42 = vld [vmem:[%s1 + $0x60] sm:$0xff]
  %v43 = vld [vmem:[%s1 + $0x68] sm:$0xff]
  %v44 = vld [vmem:[%s1 + $0x70] sm:$0xff]
  %v45 = vld [vmem:[%s1 + $0x78] sm:$0xff]
  %v46 = vld [vmem:[%s2] sm:$0xf]
  %v48 = vlaneseq
  %v49 = vshrl.u32 %v48, 7
  %v50 = vsub.s32 0, %v49
  %v51 = vrot.slane %v46, %v50
  %v52 = vlaneseq
  %v53 = vshrl.u32 %v52, 7
  %v54 = vsub.s32 1, %v53
  %v55 = vrot.slane %v46, %v54
  %v56 = vlaneseq
  %v57 = vshrl.u32 %v56, 7
  %v58 = vsub.s32 2, %v57
  %v59 = vrot.slane %v46, %v58
  %v60 = vlaneseq
  %v61 = vshrl.u32 %v60, 7
  %v62 = vsub.s32 3, %v61
  %v63 = vrot.slane %v46, %v62
  %v84 = vunpack.c.l.b16 %v30
  %v85 = vunpack.c.h.b16 %v30
  %v86 = vunpack.c.l.b16 %v31
  %v87 = vunpack.c.h.b16 %v31
  %v88 = vunpack.c.l.b16 %v32
  %v89 = vunpack.c.h.b16 %v32
  %v90 = vunpack.c.l.b16 %v33
  %v91 = vunpack.c.h.b16 %v33
  %v92 = vunpack.c.l.b16 %v34
  %v93 = vunpack.c.h.b16 %v34
  %v94 = vunpack.c.l.b16 %v35
  %v95 = vunpack.c.h.b16 %v35
  %v96 = vunpack.c.l.b16 %v36
  %v97 = vunpack.c.h.b16 %v36
  %v98 = vunpack.c.l.b16 %v37
  %v99 = vunpack.c.h.b16 %v37
  %v100 = vunpack.c.l.b16 %v38
  %v101 = vunpack.c.h.b16 %v38
  %v102 = vunpack.c.l.b16 %v39
  %v103 = vunpack.c.h.b16 %v39
  %v104 = vunpack.c.l.b16 %v40
  %v105 = vunpack.c.h.b16 %v40
  %v106 = vunpack.c.l.b16 %v41
  %v107 = vunpack.c.h.b16 %v41
  %v108 = vunpack.c.l.b16 %v42
  %v109 = vunpack.c.h.b16 %v42
  %v110 = vunpack.c.l.b16 %v43
  %v111 = vunpack.c.h.b16 %v43
  %v112 = vunpack.c.l.b16 %v44
  %v113 = vunpack.c.h.b16 %v44
  %v114 = vunpack.c.l.b16 %v45
  %v115 = vunpack.c.h.b16 %v45
  %v116 = vpack.c.b16 %v88, %v84
  %v117 = vpack.c.b16 %v89, %v85
  %v118 = vpack.c.b16 %v90, %v86
  %v119 = vpack.c.b16 %v91, %v87
  %v120 = vpack.c.b16 %v96, %v92
  %v121 = vpack.c.b16 %v97, %v93
  %v122 = vpack.c.b16 %v98, %v94
  %v123 = vpack.c.b16 %v99, %v95
  %v124 = vpack.c.b16 %v104, %v100
  %v125 = vpack.c.b16 %v105, %v101
  %v126 = vpack.c.b16 %v106, %v102
  %v127 = vpack.c.b16 %v107, %v103
  %v128 = vpack.c.b16 %v112, %v108
  %v129 = vpack.c.b16 %v113, %v109
  %v130 = vpack.c.b16 %v114, %v110
  %v131 = vpack.c.b16 %v115, %v111
  %vm148 = vcmask 523264
  %v150 = vsel %vm148, %v29, 0
  %152 = vmatprep.subr.bf16.mxu0 %v117
  %153 = vmatpush1.bf16.msra.mxu0 %v116
  %154 = vmatprep.subr.bf16.mxu0 %v121
  %155 = vmatpush1.bf16.msra.mxu0 %v120
  %156 = vmatprep.subr.bf16.mxu0 %v125
  %157 = vmatpush1.bf16.msra.mxu0 %v124
  %158 = vmatprep.subr.bf16.mxu0 %v129
  %159 = vmatpush1.bf16.msra.mxu0 %v128
  %160 = vmatprep.subr.bf16.mxu0 0
  %161 = vmatpush1.bf16.msra.mxu0 0
  %162 = vmatprep.subr.bf16.mxu0 0
  %163 = vmatpush1.bf16.msra.mxu0 0
  %164 = vmatprep.subr.bf16.mxu0 0
  %165 = vmatpush1.bf16.msra.mxu0 0
  %166 = vmatprep.subr.bf16.mxu0 0
  %167 = vmatpush1.bf16.msra.mxu0 0
  %168 = vmatprep.subr.bf16.mxu0 0
  %169 = vmatpush1.bf16.msra.mxu0 0
  %170 = vmatprep.subr.bf16.mxu0 0
  %171 = vmatpush1.bf16.msra.mxu0 0
  %172 = vmatprep.subr.bf16.mxu0 0
  %173 = vmatpush1.bf16.msra.mxu0 0
  %174 = vmatprep.subr.bf16.mxu0 0
  %175 = vmatpush1.bf16.msra.mxu0 0
  %176 = vmatprep.subr.bf16.mxu0 0
  %177 = vmatpush1.bf16.msra.mxu0 0
  %178 = vmatprep.subr.bf16.mxu0 0
  %179 = vmatpush1.bf16.msra.mxu0 0
  %180 = vmatprep.subr.bf16.mxu0 0
  %181 = vmatpush1.bf16.msra.mxu0 0
  %182 = vmatprep.subr.bf16.mxu0 0
  %183 = vmatpush1.bf16.msra.mxu0 0
  %184 = vmatprep.mubr.bf16.mxu0 0
  %185 = vmatmul.mubr.bf16.gmra.mrb[0].mxu0 %v150
  %v186 = vpop.f32.mrb[0].mxu0
  %v187 = vadd.f32 %v51, %v186
  %v188 = vpop.f32.mrb[0].mxu0
  %v189 = vadd.f32 %v55, %v188
  %v190 = vpop.f32.mrb[0].mxu0
  %v191 = vpop.f32.mrb[0].mxu0
  %192 = vdwg.mxu0
  %193 = vmatprep.subr.bf16.mxu0 %v119
  %194 = vmatpush1.bf16.msra.mxu0 %v118
  %195 = vmatprep.subr.bf16.mxu0 %v123
  %196 = vmatpush1.bf16.msra.mxu0 %v122
  %197 = vmatprep.subr.bf16.mxu0 %v127
  %198 = vmatpush1.bf16.msra.mxu0 %v126
  %199 = vmatprep.subr.bf16.mxu0 %v131
  %200 = vmatpush1.bf16.msra.mxu0 %v130
  %201 = vmatprep.subr.bf16.mxu0 0
  %202 = vmatpush1.bf16.msra.mxu0 0
  %203 = vmatprep.subr.bf16.mxu0 0
  %204 = vmatpush1.bf16.msra.mxu0 0
  %205 = vmatprep.subr.bf16.mxu0 0
  %206 = vmatpush1.bf16.msra.mxu0 0
  %207 = vmatprep.subr.bf16.mxu0 0
  %208 = vmatpush1.bf16.msra.mxu0 0
  %209 = vmatprep.subr.bf16.mxu0 0
  %210 = vmatpush1.bf16.msra.mxu0 0
  %211 = vmatprep.subr.bf16.mxu0 0
  %212 = vmatpush1.bf16.msra.mxu0 0
  %213 = vmatprep.subr.bf16.mxu0 0
  %214 = vmatpush1.bf16.msra.mxu0 0
  %215 = vmatprep.subr.bf16.mxu0 0
  %216 = vmatpush1.bf16.msra.mxu0 0
  %217 = vmatprep.subr.bf16.mxu0 0
  %218 = vmatpush1.bf16.msra.mxu0 0
  %219 = vmatprep.subr.bf16.mxu0 0
  %220 = vmatpush1.bf16.msra.mxu0 0
  %221 = vmatprep.subr.bf16.mxu0 0
  %222 = vmatpush1.bf16.msra.mxu0 0
  %223 = vmatprep.subr.bf16.mxu0 0
  %224 = vmatpush1.bf16.msra.mxu0 0
  %225 = vmatprep.mubr.bf16.mxu0 0
  %226 = vmatmul.mubr.bf16.gmra.mrb[0].mxu0 %v150
  %v227 = vpop.f32.mrb[0].mxu0
  %v228 = vadd.f32 %v59, %v227
  %v229 = vpop.f32.mrb[0].mxu0
  %v230 = vadd.f32 %v63, %v229
  %v231 = vpop.f32.mrb[0].mxu0
  %v232 = vpop.f32.mrb[0].mxu0
  %233 = vdwg.mxu0
  %v234 = vmax.f32 %v187, 0.0
  %v235 = vmax.f32 %v189, 0.0
  %v236 = vmax.f32 %v228, 0.0
  %v237 = vmax.f32 %v230, 0.0
  %v238 = vpack.c.bf16 %v234, %v234
  %v239 = vpack.c.bf16 %v235, %v235
  %v240 = vpack.c.bf16 %v236, %v236
  %v241 = vpack.c.bf16 %v237, %v237
  %v242 = vld [vmem:[%s3] sm:$0xf]
  %v243 = vld [vmem:[%s3 + $0x4] sm:$0xf]
  %v244 = vld [vmem:[%s3 + $0x8] sm:$0xf]
  %v245 = vld [vmem:[%s3 + $0xc] sm:$0xf]
  %v246 = vld [vmem:[%s3 + $0x10] sm:$0xf]
  %v247 = vld [vmem:[%s3 + $0x14] sm:$0xf]
  %v248 = vld [vmem:[%s3 + $0x18] sm:$0xf]
  %v249 = vld [vmem:[%s3 + $0x1c] sm:$0xf]
  %v250 = vld [vmem:[%s3 + $0x20] sm:$0xf]
  %v251 = vld [vmem:[%s3 + $0x24] sm:$0xf]
  %v252 = vld [vmem:[%s3 + $0x28] sm:$0xf]
  %v253 = vld [vmem:[%s3 + $0x2c] sm:$0xf]
  %v254 = vld [vmem:[%s3 + $0x30] sm:$0xf]
  %v255 = vld [vmem:[%s3 + $0x34] sm:$0xf]
  %v256 = vld [vmem:[%s3 + $0x38] sm:$0xf]
  %v257 = vld [vmem:[%s3 + $0x3c] sm:$0xf]
  %v258 = vld [vmem:[%s3 + $0x40] sm:$0xf]
  %v259 = vld [vmem:[%s3 + $0x44] sm:$0xf]
  %v260 = vld [vmem:[%s3 + $0x48] sm:$0xf]
  %v261 = vld [vmem:[%s3 + $0x4c] sm:$0xf]
  %v262 = vld [vmem:[%s3 + $0x50] sm:$0xf]
  %v263 = vld [vmem:[%s3 + $0x54] sm:$0xf]
  %v264 = vld [vmem:[%s3 + $0x58] sm:$0xf]
  %v265 = vld [vmem:[%s3 + $0x5c] sm:$0xf]
  %v266 = vld [vmem:[%s3 + $0x60] sm:$0xf]
  %v267 = vld [vmem:[%s3 + $0x64] sm:$0xf]
  %v268 = vld [vmem:[%s3 + $0x68] sm:$0xf]
  %v269 = vld [vmem:[%s3 + $0x6c] sm:$0xf]
  %v270 = vld [vmem:[%s3 + $0x70] sm:$0xf]
  %v271 = vld [vmem:[%s3 + $0x74] sm:$0xf]
  %v272 = vld [vmem:[%s3 + $0x78] sm:$0xf]
  %v273 = vld [vmem:[%s3 + $0x7c] sm:$0xf]
  %v274 = vld [vmem:[%s3 + $0x80] sm:$0xf]
  %v275 = vld [vmem:[%s3 + $0x84] sm:$0xf]
  %v276 = vld [vmem:[%s3 + $0x88] sm:$0xf]
  %v277 = vld [vmem:[%s3 + $0x8c] sm:$0xf]
  %v278 = vld [vmem:[%s3 + $0x90] sm:$0xf]
  %v279 = vld [vmem:[%s3 + $0x94] sm:$0xf]
  %v280 = vld [vmem:[%s3 + $0x98] sm:$0xf]
  %v281 = vld [vmem:[%s3 + $0x9c] sm:$0xf]
  %v282 = vld [vmem:[%s3 + $0xa0] sm:$0xf]
  %v283 = vld [vmem:[%s3 + $0xa4] sm:$0xf]
  %v284 = vld [vmem:[%s3 + $0xa8] sm:$0xf]
  %v285 = vld [vmem:[%s3 + $0xac] sm:$0xf]
  %v286 = vld [vmem:[%s3 + $0xb0] sm:$0xf]
  %v287 = vld [vmem:[%s3 + $0xb4] sm:$0xf]
  %v288 = vld [vmem:[%s3 + $0xb8] sm:$0xf]
  %v289 = vld [vmem:[%s3 + $0xbc] sm:$0xf]
  %v290 = vld [vmem:[%s3 + $0xc0] sm:$0xf]
  %v291 = vld [vmem:[%s3 + $0xc4] sm:$0xf]
  %v292 = vld [vmem:[%s3 + $0xc8] sm:$0xf]
  %v293 = vld [vmem:[%s3 + $0xcc] sm:$0xf]
  %v294 = vld [vmem:[%s3 + $0xd0] sm:$0xf]
  %v295 = vld [vmem:[%s3 + $0xd4] sm:$0xf]
  %v296 = vld [vmem:[%s3 + $0xd8] sm:$0xf]
  %v297 = vld [vmem:[%s3 + $0xdc] sm:$0xf]
  %v298 = vld [vmem:[%s3 + $0xe0] sm:$0xf]
  %v299 = vld [vmem:[%s3 + $0xe4] sm:$0xf]
  %v300 = vld [vmem:[%s3 + $0xe8] sm:$0xf]
  %v301 = vld [vmem:[%s3 + $0xec] sm:$0xf]
  %v302 = vld [vmem:[%s3 + $0xf0] sm:$0xf]
  %v303 = vld [vmem:[%s3 + $0xf4] sm:$0xf]
  %v304 = vld [vmem:[%s3 + $0xf8] sm:$0xf]
  %v305 = vld [vmem:[%s3 + $0xfc] sm:$0xf]
  %v306 = vld [vmem:[%s4] sm:$0x1]
  %v308 = vlaneseq
  %v309 = vshrl.u32 %v308, 7
  %v310 = vsub.s32 0, %v309
  %v311 = vrot.slane %v306, %v310
  %v377 = vunpack.c.l.b16 %v242
  %v378 = vunpack.c.l.b16 %v243
  %v379 = vunpack.c.l.b16 %v244
  %v380 = vunpack.c.l.b16 %v245
  %v381 = vunpack.c.l.b16 %v246
  %v382 = vunpack.c.l.b16 %v247
  %v383 = vunpack.c.l.b16 %v248
  %v384 = vunpack.c.l.b16 %v249
  %v385 = vunpack.c.l.b16 %v250
  %v386 = vunpack.c.l.b16 %v251
  %v387 = vunpack.c.l.b16 %v252
  %v388 = vunpack.c.l.b16 %v253
  %v389 = vunpack.c.l.b16 %v254
  %v390 = vunpack.c.l.b16 %v255
  %v391 = vunpack.c.l.b16 %v256
  %v392 = vunpack.c.l.b16 %v257
  %v393 = vunpack.c.l.b16 %v258
  %v394 = vunpack.c.l.b16 %v259
  %v395 = vunpack.c.l.b16 %v260
  %v396 = vunpack.c.l.b16 %v261
  %v397 = vunpack.c.l.b16 %v262
  %v398 = vunpack.c.l.b16 %v263
  %v399 = vunpack.c.l.b16 %v264
  %v400 = vunpack.c.l.b16 %v265
  %v401 = vunpack.c.l.b16 %v266
  %v402 = vunpack.c.l.b16 %v267
  %v403 = vunpack.c.l.b16 %v268
  %v404 = vunpack.c.l.b16 %v269
  %v405 = vunpack.c.l.b16 %v270
  %v406 = vunpack.c.l.b16 %v271
  %v407 = vunpack.c.l.b16 %v272
  %v408 = vunpack.c.l.b16 %v273
  %v409 = vunpack.c.l.b16 %v274
  %v410 = vunpack.c.l.b16 %v275
  %v411 = vunpack.c.l.b16 %v276
  %v412 = vunpack.c.l.b16 %v277
  %v413 = vunpack.c.l.b16 %v278
  %v414 = vunpack.c.l.b16 %v279
  %v415 = vunpack.c.l.b16 %v280
  %v416 = vunpack.c.l.b16 %v281
  %v417 = vunpack.c.l.b16 %v282
  %v418 = vunpack.c.l.b16 %v283
  %v419 = vunpack.c.l.b16 %v284
  %v420 = vunpack.c.l.b16 %v285
  %v421 = vunpack.c.l.b16 %v286
  %v422 = vunpack.c.l.b16 %v287
  %v423 = vunpack.c.l.b16 %v288
  %v424 = vunpack.c.l.b16 %v289
  %v425 = vunpack.c.l.b16 %v290
  %v426 = vunpack.c.l.b16 %v291
  %v427 = vunpack.c.l.b16 %v292
  %v428 = vunpack.c.l.b16 %v293
  %v429 = vunpack.c.l.b16 %v294
  %v430 = vunpack.c.l.b16 %v295
  %v431 = vunpack.c.l.b16 %v296
  %v432 = vunpack.c.l.b16 %v297
  %v433 = vunpack.c.l.b16 %v298
  %v434 = vunpack.c.l.b16 %v299
  %v435 = vunpack.c.l.b16 %v300
  %v436 = vunpack.c.l.b16 %v301
  %v437 = vunpack.c.l.b16 %v302
  %v438 = vunpack.c.l.b16 %v303
  %v439 = vunpack.c.l.b16 %v304
  %v440 = vunpack.c.l.b16 %v305
  %v441 = vpack.c.b16 %v378, %v377
  %v442 = vpack.c.b16 %v380, %v379
  %v443 = vpack.c.b16 %v382, %v381
  %v444 = vpack.c.b16 %v384, %v383
  %v445 = vpack.c.b16 %v386, %v385
  %v446 = vpack.c.b16 %v388, %v387
  %v447 = vpack.c.b16 %v390, %v389
  %v448 = vpack.c.b16 %v392, %v391
  %v449 = vpack.c.b16 %v394, %v393
  %v450 = vpack.c.b16 %v396, %v395
  %v451 = vpack.c.b16 %v398, %v397
  %v452 = vpack.c.b16 %v400, %v399
  %v453 = vpack.c.b16 %v402, %v401
  %v454 = vpack.c.b16 %v404, %v403
  %v455 = vpack.c.b16 %v406, %v405
  %v456 = vpack.c.b16 %v408, %v407
  %v457 = vpack.c.b16 %v410, %v409
  %v458 = vpack.c.b16 %v412, %v411
  %v459 = vpack.c.b16 %v414, %v413
  %v460 = vpack.c.b16 %v416, %v415
  %v461 = vpack.c.b16 %v418, %v417
  %v462 = vpack.c.b16 %v420, %v419
  %v463 = vpack.c.b16 %v422, %v421
  %v464 = vpack.c.b16 %v424, %v423
  %v465 = vpack.c.b16 %v426, %v425
  %v466 = vpack.c.b16 %v428, %v427
  %v467 = vpack.c.b16 %v430, %v429
  %v468 = vpack.c.b16 %v432, %v431
  %v469 = vpack.c.b16 %v434, %v433
  %v470 = vpack.c.b16 %v436, %v435
  %v471 = vpack.c.b16 %v438, %v437
  %v472 = vpack.c.b16 %v440, %v439
  %505 = vmatprep.subr.bf16.mxu0 0
  %506 = vmatpush1.bf16.msra.mxu0 %v441
  %507 = vmatprep.subr.bf16.mxu0 0
  %508 = vmatpush1.bf16.msra.mxu0 %v442
  %509 = vmatprep.subr.bf16.mxu0 0
  %510 = vmatpush1.bf16.msra.mxu0 %v443
  %511 = vmatprep.subr.bf16.mxu0 0
  %512 = vmatpush1.bf16.msra.mxu0 %v444
  %513 = vmatprep.subr.bf16.mxu0 0
  %514 = vmatpush1.bf16.msra.mxu0 %v445
  %515 = vmatprep.subr.bf16.mxu0 0
  %516 = vmatpush1.bf16.msra.mxu0 %v446
  %517 = vmatprep.subr.bf16.mxu0 0
  %518 = vmatpush1.bf16.msra.mxu0 %v447
  %519 = vmatprep.subr.bf16.mxu0 0
  %520 = vmatpush1.bf16.msra.mxu0 %v448
  %521 = vmatprep.subr.bf16.mxu0 0
  %522 = vmatpush1.bf16.msra.mxu0 %v449
  %523 = vmatprep.subr.bf16.mxu0 0
  %524 = vmatpush1.bf16.msra.mxu0 %v450
  %525 = vmatprep.subr.bf16.mxu0 0
  %526 = vmatpush1.bf16.msra.mxu0 %v451
  %527 = vmatprep.subr.bf16.mxu0 0
  %528 = vmatpush1.bf16.msra.mxu0 %v452
  %529 = vmatprep.subr.bf16.mxu0 0
  %530 = vmatpush1.bf16.msra.mxu0 %v453
  %531 = vmatprep.subr.bf16.mxu0 0
  %532 = vmatpush1.bf16.msra.mxu0 %v454
  %533 = vmatprep.subr.bf16.mxu0 0
  %534 = vmatpush1.bf16.msra.mxu0 %v455
  %535 = vmatprep.subr.bf16.mxu0 0
  %536 = vmatpush1.bf16.msra.mxu0 %v456
  %537 = vmatprep.mubr.bf16.mxu0 %v239
  %538 = vmatmul.mubr.bf16.gmra.mrb[0].mxu0 %v238
  %v539 = vpop.f32.mrb[0].mxu0
  %v540 = vadd.f32 %v311, %v539
  %v541 = vpop.f32.mrb[0].mxu0
  %v542 = vpop.f32.mrb[0].mxu0
  %v543 = vpop.f32.mrb[0].mxu0
  %544 = vdwg.mxu0
  %545 = vmatprep.subr.bf16.mxu0 0
  %546 = vmatpush1.bf16.msra.mxu0 %v457
  %547 = vmatprep.subr.bf16.mxu0 0
  %548 = vmatpush1.bf16.msra.mxu0 %v458
  %549 = vmatprep.subr.bf16.mxu0 0
  %550 = vmatpush1.bf16.msra.mxu0 %v459
  %551 = vmatprep.subr.bf16.mxu0 0
  %552 = vmatpush1.bf16.msra.mxu0 %v460
  %553 = vmatprep.subr.bf16.mxu0 0
  %554 = vmatpush1.bf16.msra.mxu0 %v461
  %555 = vmatprep.subr.bf16.mxu0 0
  %556 = vmatpush1.bf16.msra.mxu0 %v462
  %557 = vmatprep.subr.bf16.mxu0 0
  %558 = vmatpush1.bf16.msra.mxu0 %v463
  %559 = vmatprep.subr.bf16.mxu0 0
  %560 = vmatpush1.bf16.msra.mxu0 %v464
  %561 = vmatprep.subr.bf16.mxu0 0
  %562 = vmatpush1.bf16.msra.mxu0 %v465
  %563 = vmatprep.subr.bf16.mxu0 0
  %564 = vmatpush1.bf16.msra.mxu0 %v466
  %565 = vmatprep.subr.bf16.mxu0 0
  %566 = vmatpush1.bf16.msra.mxu0 %v467
  %567 = vmatprep.subr.bf16.mxu0 0
  %568 = vmatpush1.bf16.msra.mxu0 %v468
  %569 = vmatprep.subr.bf16.mxu0 0
  %570 = vmatpush1.bf16.msra.mxu0 %v469
  %571 = vmatprep.subr.bf16.mxu0 0
  %572 = vmatpush1.bf16.msra.mxu0 %v470
  %573 = vmatprep.subr.bf16.mxu0 0
  %574 = vmatpush1.bf16.msra.mxu0 %v471
  %575 = vmatprep.subr.bf16.mxu0 0
  %576 = vmatpush1.bf16.msra.mxu0 %v472
  %577 = vmatprep.mubr.bf16.mxu0 %v241
  %578 = vmatmul.mubr.bf16.gmra.mrb[0].mxu0 %v240
  %v579 = vpop.f32.mrb[0].mxu0
  %v580 = vadd.f32 %v540, %v579
  %v581 = vpop.f32.mrb[0].mxu0
  %v582 = vpop.f32.mrb[0].mxu0
  %v583 = vpop.f32.mrb[0].mxu0
  %584 = vdwg.mxu0
  %v585 = vmax.f32 %v580, 0.0
  %v586 = vpack.c.bf16 %v585, %v585
  %v587 = vld [vmem:[%s5] sm:$0xf]
  %v588 = vld [vmem:[%s5 + $0x4] sm:$0xf]
  %v589 = vld [vmem:[%s5 + $0x8] sm:$0xf]
  %v590 = vld [vmem:[%s5 + $0xc] sm:$0xf]
  %v591 = vld [vmem:[%s5 + $0x10] sm:$0xf]
  %v592 = vld [vmem:[%s5 + $0x14] sm:$0xf]
  %v593 = vld [vmem:[%s5 + $0x18] sm:$0xf]
  %v594 = vld [vmem:[%s5 + $0x1c] sm:$0xf]
  %v595 = vld [vmem:[%s5 + $0x20] sm:$0xf]
  %v596 = vld [vmem:[%s5 + $0x24] sm:$0xf]
  %v597 = vld [vmem:[%s5 + $0x28] sm:$0xf]
  %v598 = vld [vmem:[%s5 + $0x2c] sm:$0xf]
  %v599 = vld [vmem:[%s5 + $0x30] sm:$0xf]
  %v600 = vld [vmem:[%s5 + $0x34] sm:$0xf]
  %v601 = vld [vmem:[%s5 + $0x38] sm:$0xf]
  %v602 = vld [vmem:[%s5 + $0x3c] sm:$0xf]
  %v619 = vunpack.c.l.b16 %v587
  %v620 = vunpack.c.l.b16 %v588
  %v621 = vunpack.c.l.b16 %v589
  %v622 = vunpack.c.l.b16 %v590
  %v623 = vunpack.c.l.b16 %v591
  %v624 = vunpack.c.l.b16 %v592
  %v625 = vunpack.c.l.b16 %v593
  %v626 = vunpack.c.l.b16 %v594
  %v627 = vunpack.c.l.b16 %v595
  %v628 = vunpack.c.l.b16 %v596
  %v629 = vunpack.c.l.b16 %v597
  %v630 = vunpack.c.l.b16 %v598
  %v631 = vunpack.c.l.b16 %v599
  %v632 = vunpack.c.l.b16 %v600
  %v633 = vunpack.c.l.b16 %v601
  %v634 = vunpack.c.l.b16 %v602
  %v635 = vpack.c.b16 %v620, %v619
  %v636 = vpack.c.b16 %v622, %v621
  %v637 = vpack.c.b16 %v624, %v623
  %v638 = vpack.c.b16 %v626, %v625
  %v639 = vpack.c.b16 %v628, %v627
  %v640 = vpack.c.b16 %v630, %v629
  %v641 = vpack.c.b16 %v632, %v631
  %v642 = vpack.c.b16 %v634, %v633
  %651 = vmatprep.subr.bf16.mxu0 0
  %652 = vmatpush1.bf16.msra.mxu0 %v635
  %653 = vmatprep.subr.bf16.mxu0 0
  %654 = vmatpush1.bf16.msra.mxu0 %v636
  %655 = vmatprep.subr.bf16.mxu0 0
  %656 = vmatpush1.bf16.msra.mxu0 %v637
  %657 = vmatprep.subr.bf16.mxu0 0
  %658 = vmatpush1.bf16.msra.mxu0 %v638
  %659 = vmatprep.subr.bf16.mxu0 0
  %660 = vmatpush1.bf16.msra.mxu0 %v639
  %661 = vmatprep.subr.bf16.mxu0 0
  %662 = vmatpush1.bf16.msra.mxu0 %v640
  %663 = vmatprep.subr.bf16.mxu0 0
  %664 = vmatpush1.bf16.msra.mxu0 %v641
  %665 = vmatprep.subr.bf16.mxu0 0
  %666 = vmatpush1.bf16.msra.mxu0 %v642
  %667 = vmatprep.subr.bf16.mxu0 0
  %668 = vmatpush1.bf16.msra.mxu0 0
  %669 = vmatprep.subr.bf16.mxu0 0
  %670 = vmatpush1.bf16.msra.mxu0 0
  %671 = vmatprep.subr.bf16.mxu0 0
  %672 = vmatpush1.bf16.msra.mxu0 0
  %673 = vmatprep.subr.bf16.mxu0 0
  %674 = vmatpush1.bf16.msra.mxu0 0
  %675 = vmatprep.subr.bf16.mxu0 0
  %676 = vmatpush1.bf16.msra.mxu0 0
  %677 = vmatprep.subr.bf16.mxu0 0
  %678 = vmatpush1.bf16.msra.mxu0 0
  %679 = vmatprep.subr.bf16.mxu0 0
  %680 = vmatpush1.bf16.msra.mxu0 0
  %681 = vmatprep.subr.bf16.mxu0 0
  %682 = vmatpush1.bf16.msra.mxu0 0
  %683 = vmatprep.mubr.bf16.mxu0 0
  %684 = vmatmul.mubr.bf16.gmra.mrb[0].mxu0 %v586
  %v685 = vpop.f32.mrb[0].mxu0
  %v686 = vadd.f32 0.0, %v685
  %v687 = vpop.f32.mrb[0].mxu0
  %v688 = vpop.f32.mrb[0].mxu0
  %v689 = vpop.f32.mrb[0].mxu0
  %690 = vdwg.mxu0
  %s691 = sld [smem:[#allocation2]]
  %v692 = vstv %s691
  %v693 = vadd.f32 %v686, %v692
  %v694 = vsub.f32 0.0, %v693
  %v695 = vmul.f32 %v694, 1.442695
  %v696 = vpow.pop %v695
  %v697 = vadd.f32 %v696, 1.0
  %v698 = vrcp.pop %v697
  %vm699 = vcmask 7168
  %700 = vst.msk [vmem:[%s7] sm:$0xff] %vm699, %v698
  // Predicated region
  $region30: #{prior_discriminator.1} parent=0 // pred_check
    _
  $region31: #{prior_discriminator.1} parent=0 // pred_check_branch
    %702 = sbr.rel (0) target = $region33
  $region32: #{prior_discriminator.1} parent=0 // pred_region
    _
  $region33: #{prior_discriminator.1} parent=0 // pred_fallthru
    _
  // Predicated region
  $region34: #{prior_discriminator.1} parent=0 // pred_check
    _
  $region35: #{prior_discriminator.1} parent=0 // pred_check_branch
    %704 = sbr.rel (0) target = $region37
  $region36: #{prior_discriminator.1} parent=0 // pred_region
    _
  $region37: #{prior_discriminator.1} parent=0 // pred_fallthru
    _

</llo_original>
